<compile_context>
chip_gen: v6e
topology: v6e:2x2x1
jax: 0.10.0
libtpu: 0.0.40
codegen_flags: <defaults>
</compile_context>

<pallas_src>
import functools

import numpy as np

import jax
import jax.numpy as jnp
from jax import lax
from jax.experimental import pallas as pl
from jax.experimental.pallas import tpu as pltpu


TM_MAX = 256      # sublane tile upper bound
TN_MAX = 512      # lane tile upper bound (multiple of 128)
CHUNK_ROWS = 16   # in-kernel row-chunk size (keeps temporaries in vregs)


def _cdiv(a, b):
    return -(-a // b)


def _round_up(a, b):
    return _cdiv(a, b) * b


def _choose_slab(N, C, H, W):
    """Pick a lane-dense 2-D slab (M2, K2) for the flattened NCHW tensor.

    Returns (M2, K2, pad_elems).  K2 is always a multiple of 128 so output
    stores are never lane-masked.  pad_elems > 0 only when no copy-free
    reshape exists (then a small zero tail is appended and sliced off after).
    """
    T = N * C * H * W
    NC, K = N * C, H * W
    if K % 128 == 0:                       # natural layout is already lane-dense
        return NC, K, 0
    # Free reshape: largest 128-multiple divisor of T, capped at TN_MAX.
    kmax = max(1, min(TN_MAX, T) // 128)
    for k in range(kmax, 0, -1):
        if T % (128 * k) == 0:
            return T // (128 * k), 128 * k, 0
    # Ragged: pad the flat tail up to a multiple of 128.
    Tp = _round_up(T, 128)
    kmax = max(1, min(TN_MAX, Tp) // 128)
    K2 = 128
    for k in range(kmax, 0, -1):
        if Tp % (128 * k) == 0:
            K2 = 128 * k
            break
    return Tp // K2, K2, Tp - T


def _quantize_chunk(x, levels, mids, sorted_levels, sigma, compute_soft):
    """Elementwise nearest-level quantization of one (rows, TN) f32 chunk.

    `levels` / `mids` / `sigma` are compile-time Python floats (module
    parameters), so every per-level scalar is an immediate splat.
    """
    L = len(levels)
    if sorted_levels:
        # Sorted levels: L-1 midpoint compares.  Strict '>' keeps the
        # first-min tie-break of torch.min; NaN compares False everywhere so a
        # NaN input maps to symbol 0 / levels[0].
        idx = jnp.zeros(x.shape, jnp.int32)
        lv_best = jnp.full(x.shape, levels[0], jnp.float32)
        for l in range(L - 1):
            gt = x > mids[l]
            idx = idx + gt.astype(jnp.int32)
            lv_best = jnp.where(gt, jnp.float32(levels[l + 1]), lv_best)
    else:
        # Fallback (unsorted levels): explicit squared-distance argmin with a
        # first-min tie-break (sigma-invariant, so no scaling needed here).
        diff = x - levels[0]
        best_d = diff * diff
        idx = jnp.zeros(x.shape, jnp.int32)
        lv_best = jnp.full(x.shape, levels[0], jnp.float32)
        for l in range(1, L):
            diff = x - levels[l]
            d = diff * diff
            take = d < best_d
            best_d = jnp.where(take, d, best_d)
            idx = jnp.where(take, jnp.int32(l), idx)
            lv_best = jnp.where(take, jnp.float32(levels[l]), lv_best)

    if not compute_soft:
        return lv_best, idx, None

    # Optional soft path (off by default): numerically stable softmax over
    # -sigma * (x - lv)^2; the max logit sits at lv_best, so every exponent
    # is <= 0.  Exact division (not the approx EUP reciprocal) because this
    # value is only ever used for a (future) gradient path.
    db = x - lv_best
    best_sd = db * db
    num = jnp.zeros_like(x)
    den = jnp.zeros_like(x)
    for l in range(L):
        d = x - levels[l]
        e = jnp.exp((best_sd - d * d) * sigma)
        num = num + levels[l] * e
        den = den + e
    x_soft = num / den
    return lv_best, idx, x_soft


def _quantizer_kernel(x_ref, *out_refs, levels, mids, sorted_levels, sigma,
                      compute_soft, chunk_rows):
    if compute_soft:
        xhard_ref, sym_ref, xsoft_ref = out_refs
    else:
        xhard_ref, sym_ref = out_refs
        xsoft_ref = None

    tm = x_ref.shape[0]
    # Chunk the (TM, TN) tile over row slices so the live set per step is a
    # handful of vregs instead of ~128 (whole-tile ops force VMEM round-trips
    # through the single store slot).  DMA tiles stay large; only compute is
    # chunked.  Fall back to a single chunk when TM is small / not divisible.
    ch = chunk_rows if (chunk_rows and tm % chunk_rows == 0 and tm > chunk_rows) else tm
    n_chunks = tm // ch

    def process(rows):
        x = x_ref[rows, :].astype(jnp.float32)
        lv_best, idx, x_soft = _quantize_chunk(
            x, levels, mids, sorted_levels, sigma, compute_soft)
        xhard_ref[rows, :] = lv_best.astype(xhard_ref.dtype)
        sym_ref[rows, :] = idx.astype(sym_ref.dtype)
        if xsoft_ref is not None:
            xsoft_ref[rows, :] = x_soft.astype(xsoft_ref.dtype)

    if n_chunks == 1:
        process(pl.ds(0, tm))
    else:
        def body(c, carry):
            r0 = pl.multiple_of(c * ch, ch)
            process(pl.ds(r0, ch))
            return carry
        lax.fori_loop(0, n_chunks, body, 0, unroll=True)


def _quantizer_pallas(x, levels, sigma, *, compute_soft, symbols_dtype,
                      chunk_rows=CHUNK_ROWS):
    """Runs the Pallas kernel.  Returns (x_hard, symbols[, x_soft_true])."""
    assert x.ndim == 4, "Expected NCHW"
    N, C, H, W = x.shape

    # levels / sigma are module parameters (static config), baked into the
    # kernel as compile-time constants.  Do not trace over them.
    levels_np = np.asarray(levels, dtype=np.float32)
    assert levels_np.ndim == 1, "Expected 1D levels"
    L = int(levels_np.shape[0])
    lv = tuple(float(v) for v in levels_np)
    sorted_levels = (L == 1) or bool(np.all(np.diff(levels_np) > 0))
    mids = tuple((lv[i] + lv[i + 1]) * 0.5 for i in range(L - 1)) if sorted_levels else ()

    T = N * C * H * W
    M2, K2, pad = _choose_slab(N, C, H, W)

    xf = x.reshape(-1)
    if pad:
        xf = jnp.pad(xf, (0, pad))
    x2d = xf.reshape(M2, K2)

    # Tile selection: TN is a multiple of 128 (lane-dense, unmasked stores);
    # TM is either the full sublane dim or a multiple of 32 (keeps sub-32-bit
    # symbol dtypes tile-aligned when requested).
    TN = min(TN_MAX, K2)
    TM = M2 if M2 <= 32 else min(TM_MAX, (M2 // 32) * 32)
    # Megacore (v7x has 2 TensorCores): make sure the grid has >= 2 blocks
    # along a parallel axis whenever the slab allows it.
    if _cdiv(M2, TM) * _cdiv(K2, TN) < 2:
        if M2 >= 64:
            TM = _round_up(_cdiv(M2, 2), 32)
        elif K2 >= 256:
            TN = _round_up(_cdiv(K2, 2), 128)
    grid = (_cdiv(M2, TM), _cdiv(K2, TN))

    blk = lambda i, j: (i, j)
    out_shapes = [jax.ShapeDtypeStruct((M2, K2), x.dtype),
                  jax.ShapeDtypeStruct((M2, K2), symbols_dtype)]
    out_specs = [pl.BlockSpec((TM, TN), blk), pl.BlockSpec((TM, TN), blk)]
    if compute_soft:
        out_shapes.append(jax.ShapeDtypeStruct((M2, K2), x.dtype))
        out_specs.append(pl.BlockSpec((TM, TN), blk))

    kernel = functools.partial(
        _quantizer_kernel, levels=lv, mids=mids, sorted_levels=sorted_levels,
        sigma=float(sigma), compute_soft=compute_soft, chunk_rows=chunk_rows)

    outs = pl.pallas_call(
        kernel,
        out_shape=tuple(out_shapes),
        grid=grid,
        in_specs=[pl.BlockSpec((TM, TN), blk)],
        out_specs=tuple(out_specs),
        # ~3-4 MiB of double-buffered blocks: fits every generation's scoped
        # VMEM default, so no vmem_limit_bytes override is needed.
        compiler_params=pltpu.CompilerParams(
            dimension_semantics=("parallel", "parallel")),
    )(x2d)

    def unflatten(a):
        if pad:
            a = a.reshape(-1)[:T]
        return a.reshape(N, C, H, W)

    return tuple(unflatten(o) for o in outs)


def quantizer_forward(x, levels, sigma=1.0, *, compute_soft=False,
                      symbols_dtype=jnp.int32):
    """Forward of the PyTorch Quantizer: returns (x_soft, x_hard, symbols).

    The forward value of x_soft equals x_hard (torch's `x_soft.data = x_hard`),
    so by default the soft path is skipped entirely.  symbols are emitted as
    int32 (values identical to torch's int64); pass symbols_dtype=jnp.int8 to
    shrink the symbols HBM write when L <= 127.
    """
    outs = _quantizer_pallas(x, levels, sigma, compute_soft=compute_soft,
                             symbols_dtype=symbols_dtype)
    x_hard, symbols = outs[0], outs[1]
    if compute_soft:
        soft = outs[2]
        # Straight-through: forward value of x_soft is exactly x_hard.
        # TODO(synk): pallas_call has no VJP; wrap in jax.custom_vjp (backward
        # through the soft path) before relying on gradients through x_soft.
        x_soft = lax.stop_gradient(x_hard) + (soft - lax.stop_gradient(soft))
    else:
        x_soft = x_hard
    return x_soft, x_hard, symbols


# ----------------------------- self-test ------------------------------------


def _reference(x, levels, sigma=1.0):
    """Pure-JAX mirror of the PyTorch forward (spec)."""
    N, C, H, W = x.shape
    xr = x.reshape(N, C, H * W, 1)
    d = (xr - levels) ** 2
    phi = jax.nn.softmax(-sigma * d, axis=-1)
    x_soft_true = jnp.sum(levels * phi, axis=-1).reshape(N, C, H, W)
    symbols = jnp.argmin(d, axis=-1).reshape(N, C, H, W).astype(jnp.int32)
    x_hard = levels[symbols]
    return x_soft_true, x_hard, symbols


def _check_hard_outputs(x, x_hard, symbols, levels_np, ref_hard, ref_sym):
    symbols = np.asarray(symbols)
    ref_sym = np.asarray(ref_sym)
    mism = symbols != ref_sym
    if mism.any():
        # The kernel decides via midpoint compares; it may differ from the
        # reference's f32 argmin-of-squared-distances only within float
        # rounding of a decision boundary, where both answers are equally
        # valid nearest levels.
        mids = (levels_np[:-1] + levels_np[1:]) * 0.5
        xv = np.asarray(x)[mism]
        bdist = np.min(np.abs(xv[:, None] - mids[None, :]), axis=1)
        assert np.all(bdist < 1e-5), "symbols mismatch away from a decision boundary"
        assert np.all(np.abs(symbols[mism].astype(np.int64)
                             - ref_sym[mism].astype(np.int64)) == 1), \
            "symbols mismatch by more than one level"
    # x_hard must be exactly the level addressed by the emitted symbol.
    assert np.array_equal(np.asarray(x_hard), levels_np[symbols]), \
        "x_hard != levels[symbols]"
    ok = ~mism
    assert np.array_equal(np.asarray(x_hard)[ok], np.asarray(ref_hard)[ok]), \
        "x_hard mismatch"


if __name__ == "__main__":
    key = jax.random.PRNGKey(0)

    # Module "parameters": L quantization levels + sigma.
    L = 8
    levels = jnp.linspace(-1.0, 1.0, L, dtype=jnp.float32)
    levels_np = np.asarray(levels, dtype=np.float32)

    shapes = [
        (2, 4, 16, 16),   # lane-aligned H*W = 256; exercises megacore split
        (3, 16, 16, 16),  # M2 = 48: multi-row grid + in-kernel chunked fori
        (2, 3, 14, 14),   # ragged H*W = 196: padded lane-dense slab path
    ]
    for shp in shapes:
        key, sub = jax.random.split(key)
        x = jax.random.normal(sub, shp, dtype=jnp.float32)
        x_soft, x_hard, symbols = quantizer_forward(x, levels, 1.0)
        jax.block_until_ready((x_soft, x_hard, symbols))
        _, ref_hard, ref_sym = _reference(x, levels, 1.0)
        _check_hard_outputs(x, x_hard, symbols, levels_np, ref_hard, ref_sym)
        # Forward value of x_soft equals x_hard (torch: x_soft.data = x_hard).
        assert np.array_equal(np.asarray(x_soft), np.asarray(x_hard)), \
            f"x_soft forward value mismatch for {shp}"

    # Optional soft path (kept for a future custom_vjp): validate the true
    # softmax-weighted value against the reference.
    x = jax.random.normal(jax.random.PRNGKey(0), (2, 4, 16, 16), dtype=jnp.float32)
    soft_true = _quantizer_pallas(x, levels, 2.0, compute_soft=True,
                                  symbols_dtype=jnp.int32)[2]
    jax.block_until_ready(soft_true)
    ref_soft_true = _reference(x, levels, 2.0)[0]
    assert jnp.allclose(soft_true, ref_soft_true, atol=1e-5, rtol=1e-5), \
        "x_soft (soft path) mismatch"

    print("KERNEL_OK")
</pallas_src>

<mosaic_0001>
module attributes {stable_mosaic.version = 11 : i64} {
  func.func @_quantizer_kernel(%arg0: i32, %arg1: i32, %arg2: memref<8x128xf32, #tpu.memory_space<vmem>>, %arg3: memref<8x128xf32, #tpu.memory_space<vmem>>, %arg4: memref<8x128xi32, #tpu.memory_space<vmem>>) attributes {dimension_semantics = [#tpu.dimension_semantics<parallel>, #tpu.dimension_semantics<parallel>], iteration_bounds = array<i64: 1, 2>, scalar_prefetch = 0 : i64, scratch_operands = 0 : i64, tpu.core_type = #tpu.core_type<tc>, window_params = [{transform_indices = @transform_0, window_bounds = array<i64: 8, 128>}, {transform_indices = @transform_1, window_bounds = array<i64: 8, 128>}, {transform_indices = @transform_2, window_bounds = array<i64: 8, 128>}]} {
    %c0 = arith.constant 0 : index
    %c0_0 = arith.constant 0 : index
    %0 = vector.load %arg2[%c0, %c0_0] : memref<8x128xf32, #tpu.memory_space<vmem>>, vector<8x128xf32>
    %c0_i32 = arith.constant 0 : i32
    %1 = vector.broadcast %c0_i32 : i32 to vector<8x128xi32>
    %cst = arith.constant -1.000000e+00 : f32
    %2 = vector.broadcast %cst : f32 to vector<8x128xf32>
    %cst_1 = arith.constant -0.857142865 : f32
    %3 = vector.broadcast %cst_1 : f32 to vector<8x128xf32>
    %4 = arith.cmpf ogt, %0, %3 : vector<8x128xf32>
    %5 = arith.extui %4 : vector<8x128xi1> to vector<8x128xi32>
    %6 = arith.addi %1, %5 : vector<8x128xi32>
    %cst_2 = arith.constant -0.714285731 : f32
    %7 = vector.broadcast %cst_2 : f32 to vector<8x128xf32>
    %8 = arith.select %4, %7, %2 : vector<8x128xi1>, vector<8x128xf32>
    %cst_3 = arith.constant -0.571428597 : f32
    %9 = vector.broadcast %cst_3 : f32 to vector<8x128xf32>
    %10 = arith.cmpf ogt, %0, %9 : vector<8x128xf32>
    %11 = arith.extui %10 : vector<8x128xi1> to vector<8x128xi32>
    %12 = arith.addi %6, %11 : vector<8x128xi32>
    %cst_4 = arith.constant -0.428571433 : f32
    %13 = vector.broadcast %cst_4 : f32 to vector<8x128xf32>
    %14 = arith.select %10, %13, %8 : vector<8x128xi1>, vector<8x128xf32>
    %cst_5 = arith.constant -0.285714269 : f32
    %15 = vector.broadcast %cst_5 : f32 to vector<8x128xf32>
    %16 = arith.cmpf ogt, %0, %15 : vector<8x128xf32>
    %17 = arith.extui %16 : vector<8x128xi1> to vector<8x128xi32>
    %18 = arith.addi %12, %17 : vector<8x128xi32>
    %cst_6 = arith.constant -0.14285709 : f32
    %19 = vector.broadcast %cst_6 : f32 to vector<8x128xf32>
    %20 = arith.select %16, %19, %14 : vector<8x128xi1>, vector<8x128xf32>
    %cst_7 = arith.constant 5.21540642E-8 : f32
    %21 = vector.broadcast %cst_7 : f32 to vector<8x128xf32>
    %22 = arith.cmpf ogt, %0, %21 : vector<8x128xf32>
    %23 = arith.extui %22 : vector<8x128xi1> to vector<8x128xi32>
    %24 = arith.addi %18, %23 : vector<8x128xi32>
    %cst_8 = arith.constant 0.142857194 : f32
    %25 = vector.broadcast %cst_8 : f32 to vector<8x128xf32>
    %26 = arith.select %22, %25, %20 : vector<8x128xi1>, vector<8x128xf32>
    %cst_9 = arith.constant 0.285714328 : f32
    %27 = vector.broadcast %cst_9 : f32 to vector<8x128xf32>
    %28 = arith.cmpf ogt, %0, %27 : vector<8x128xf32>
    %29 = arith.extui %28 : vector<8x128xi1> to vector<8x128xi32>
    %30 = arith.addi %24, %29 : vector<8x128xi32>
    %cst_10 = arith.constant 0.428571463 : f32
    %31 = vector.broadcast %cst_10 : f32 to vector<8x128xf32>
    %32 = arith.select %28, %31, %26 : vector<8x128xi1>, vector<8x128xf32>
    %cst_11 = arith.constant 0.571428657 : f32
    %33 = vector.broadcast %cst_11 : f32 to vector<8x128xf32>
    %34 = arith.cmpf ogt, %0, %33 : vector<8x128xf32>
    %35 = arith.extui %34 : vector<8x128xi1> to vector<8x128xi32>
    %36 = arith.addi %30, %35 : vector<8x128xi32>
    %cst_12 = arith.constant 0.714285851 : f32
    %37 = vector.broadcast %cst_12 : f32 to vector<8x128xf32>
    %38 = arith.select %34, %37, %32 : vector<8x128xi1>, vector<8x128xf32>
    %cst_13 = arith.constant 0.857142925 : f32
    %39 = vector.broadcast %cst_13 : f32 to vector<8x128xf32>
    %40 = arith.cmpf ogt, %0, %39 : vector<8x128xf32>
    %41 = arith.extui %40 : vector<8x128xi1> to vector<8x128xi32>
    %42 = arith.addi %36, %41 : vector<8x128xi32>
    %cst_14 = arith.constant 1.000000e+00 : f32
    %43 = vector.broadcast %cst_14 : f32 to vector<8x128xf32>
    %44 = arith.select %40, %43, %38 : vector<8x128xi1>, vector<8x128xf32>
    %c0_15 = arith.constant 0 : index
    %c0_16 = arith.constant 0 : index
    %45 = vector.load %arg3[%c0_15, %c0_16] : memref<8x128xf32, #tpu.memory_space<vmem>>, vector<8x128xf32>
    tpu.vector_store %arg3[%c0_15, %c0_16], %44 {strides = array<i32>} : memref<8x128xf32, #tpu.memory_space<vmem>>, vector<8x128xf32>,
    %c0_17 = arith.constant 0 : index
    %c0_18 = arith.constant 0 : index
    %46 = vector.load %arg4[%c0_17, %c0_18] : memref<8x128xi32, #tpu.memory_space<vmem>>, vector<8x128xi32>
    tpu.vector_store %arg4[%c0_17, %c0_18], %42 {strides = array<i32>} : memref<8x128xi32, #tpu.memory_space<vmem>>, vector<8x128xi32>,
    return
  }
  func.func @transform_0(%arg0: i32, %arg1: i32) -> (i32, i32) {
    %c0_i32 = arith.constant 0 : i32
    return %arg0, %arg1 : i32, i32
  }
  func.func @transform_1(%arg0: i32, %arg1: i32) -> (i32, i32) {
    %c0_i32 = arith.constant 0 : i32
    return %arg0, %arg1 : i32, i32
  }
  func.func @transform_2(%arg0: i32, %arg1: i32) -> (i32, i32) {
    %c0_i32 = arith.constant 0 : i32
    return %arg0, %arg1 : i32, i32
  }
}

</mosaic_0001>

<llo_original>
// kernel: tpu_custom_call.1
$region0: #{tpu_custom_call.1}
  #allocation0 [shape = 'u32[]', space=smem, size = 0x4, offset = 0x4, fixed_abs, tag = 'smem constant byte address 0x4 - core index']
  #allocation1 [shape = 'u32[144,128]{1,0:T(1,128)}', space=vmem, size = 0x12000, scoped, tag = 'internal scratch']
  %s0 = inlined_call_operand.hbm [shape: f32[8,256], index: 0, kind: input, shape index: {}]
  %s1 = inlined_call_operand.hbm [shape: f32[8,256], index: 1, kind: output, shape index: {0}]
  %s2 = inlined_call_operand.hbm [shape: s32[8,256], index: 2, kind: output, shape index: {1}]
  %3 = xla_tuple %s1, %s2
  %s4 = sld [smem:[#allocation0]]
  $region49: #{tpu_custom_call.1} parent=0
    _
  %s6 = ssub.s32 1, %s4
  %s7 = scalar_select 0, %s6, %s4
  $region1: #{tpu_custom_call.1} parent=0
    #allocation2 [shape = 'u8[8192]{0}', space=vmem, size = 0x2000, scoped, tag = 'input window, operand 0']
    #allocation3 [shape = 's32[2]{0}', space=sflag, size = 0x8, scoped, tag = 'scoped memory for tpu_custom_call.1']
    #allocation4 [shape = 's32[2]{0}', space=sflag, size = 0x8, scoped, tag = 'scoped memory for tpu_custom_call.1']
    #allocation5 [shape = 'u8[8192]{0}', space=vmem, size = 0x2000, scoped, tag = 'output window, operand 0']
    #allocation6 [shape = 'u8[8192]{0}', space=vmem, size = 0x2000, scoped, tag = 'output window, operand 1']
    #allocation7 [shape = 's32[2]{0}', space=sflag, size = 0x8, scoped, tag = 'scoped memory for tpu_custom_call.1']
    %8 = vsyncpa [#allocation3], 0
    %s9 = scalar_lea.sflag [#allocation3], 1
    %10 = vsyncpa %s9, 0
    %11 = vsyncpa [#allocation4], 0
    %s12 = scalar_lea.sflag [#allocation4], 1
    %13 = vsyncpa %s12, 0
    %14 = vsyncpa [#allocation7], 0
    %s15 = scalar_lea.sflag [#allocation7], 1
    %16 = vsyncpa %s15, 0
    loop: start=0, step=1, limit=4
    $region2: #{tpu_custom_call.1} parent=1 // loop_pre_header
      _
    $region3: #{tpu_custom_call.1} parent=1 // loop_header
      %s18 = sphi 0, %s22
      %p19 = scmp.ge.s32.totalorder %s18, 4
      %s25 = sphi 0, %s37
      %s26 = sphi 0, %s33
      %s27 = sphi 0, %s25
      %s28 = sphi 0, %s26
      %s29 = sphi 0, %s27
      %s30 = sphi 0, %s28
      %s42 = sphi 0, %s44
      %s45 = sphi 0, %s42
      %s46 = sphi 0, %s45
      %s62 = sphi 0, %s46
      %s70 = sphi 0, %s72
      %s73 = sphi 0, %s70
      %s74 = sphi 0, %s73
      %s90 = sphi 0, %s74
      %s98 = sphi 0, %s100
      %s101 = sphi 0, %s98
      %s102 = sphi 0, %s101
      %s118 = sphi 0, %s102
    $region4: #{tpu_custom_call.1} parent=1 // loop_header_branch
      %21 = sbr.rel (%p19) target = $region8
    $region5: #{tpu_custom_call.1} parent=1 // loop_body
      %s23 = ssub.s32 %s18, 1
      %s24 = ssub.s32 %s18, 2
      %s31 = sadd.s32 1, %s26
      %p32 = scmp.ge.s32.totalorder %s31, 2
      %s33 = scalar_select %p32, 0, %s31
      %s34 = sadd.s32 1, %s25
      %s35 = scalar_select %p32, %s34, %s25
      %p36 = scmp.ge.s32.totalorder %s35, 1
      %s37 = scalar_select %p36, 0, %s35
      %s38 = ssub.s32 %s25, %s37
      %s39 = ssub.s32 %s26, %s33
      %s40 = sor.u32 %s38, %s39
      %p41 = scmp.eq.s32.totalorder %s40, 0
      %s43 = sadd.s32 %s42, 1
      %s44 = scalar_select %p41, %s42, %s43
      %p47 = pneg %p41
      %p48 = scmp.eq.s32.totalorder %s18, 1
      %p49 = por %p47, %p48
      %p50 = scmp.ne.s32.totalorder %s42, %s45
      %p51 = scmp.eq.s32.totalorder %s18, 0
      %p52 = por %p50, %p51
      %p53 = scmp.ne.s32.totalorder %s42, %s45
      %p54 = scmp.eq.s32.totalorder %s23, 1
      %p55 = por %p53, %p54
      %p56 = scmp.ne.s32.totalorder %s45, %s46
      %p57 = scmp.eq.s32.totalorder %s23, 0
      %p58 = por %p56, %p57
      %p59 = scmp.ne.s32.totalorder %s45, %s46
      %p60 = scmp.eq.s32.totalorder %s24, 1
      %p61 = por %p59, %p60
      %p63 = scmp.ne.s32.totalorder %s46, %s62
      %p64 = scmp.eq.s32.totalorder %s24, 0
      %p65 = por %p63, %p64
      %s66 = ssub.s32 %s25, %s37
      %s67 = ssub.s32 %s26, %s33
      %s68 = sor.u32 %s66, %s67
      %p69 = scmp.eq.s32.totalorder %s68, 0
      %s71 = sadd.s32 %s70, 1
      %s72 = scalar_select %p69, %s70, %s71
      %p75 = pneg %p69
      %p76 = scmp.eq.s32.totalorder %s18, 1
      %p77 = por %p75, %p76
      %p78 = scmp.ne.s32.totalorder %s70, %s73
      %p79 = scmp.eq.s32.totalorder %s18, 0
      %p80 = por %p78, %p79
      %p81 = scmp.ne.s32.totalorder %s70, %s73
      %p82 = scmp.eq.s32.totalorder %s23, 1
      %p83 = por %p81, %p82
      %p84 = scmp.ne.s32.totalorder %s73, %s74
      %p85 = scmp.eq.s32.totalorder %s23, 0
      %p86 = por %p84, %p85
      %p87 = scmp.ne.s32.totalorder %s73, %s74
      %p88 = scmp.eq.s32.totalorder %s24, 1
      %p89 = por %p87, %p88
      %p91 = scmp.ne.s32.totalorder %s74, %s90
      %p92 = scmp.eq.s32.totalorder %s24, 0
      %p93 = por %p91, %p92
      %s94 = ssub.s32 %s25, %s37
      %s95 = ssub.s32 %s26, %s33
      %s96 = sor.u32 %s94, %s95
      %p97 = scmp.eq.s32.totalorder %s96, 0
      %s99 = sadd.s32 %s98, 1
      %s100 = scalar_select %p97, %s98, %s99
      %p103 = pneg %p97
      %p104 = scmp.eq.s32.totalorder %s18, 1
      %p105 = por %p103, %p104
      %p106 = scmp.ne.s32.totalorder %s98, %s101
      %p107 = scmp.eq.s32.totalorder %s18, 0
      %p108 = por %p106, %p107
      %p109 = scmp.ne.s32.totalorder %s98, %s101
      %p110 = scmp.eq.s32.totalorder %s23, 1
      %p111 = por %p109, %p110
      %p112 = scmp.ne.s32.totalorder %s101, %s102
      %p113 = scmp.eq.s32.totalorder %s23, 0
      %p114 = por %p112, %p113
      %p115 = scmp.ne.s32.totalorder %s101, %s102
      %p116 = scmp.eq.s32.totalorder %s24, 1
      %p117 = por %p115, %p116
      %p119 = scmp.ne.s32.totalorder %s102, %s118
      %p120 = scmp.eq.s32.totalorder %s24, 0
      %p121 = por %p119, %p120
      %p122 = scmp.le.s32.totalorder 1, %s18
      %p123 = scmp.lt.s32.totalorder %s18, 3
      %p124 = pnand %p122, %p123
      %p125 = pneg %p124
      // Predicated region
      $region9: #{tpu_custom_call.1} parent=5 // pred_check
        _
      $region10: #{tpu_custom_call.1} parent=5 // pred_check_branch
        %127 = sbr.rel (%p124) target = $region12
      $region11: #{tpu_custom_call.1} parent=5 // pred_region
        %s128 = ssub.s32 %s18, 1
      $region12: #{tpu_custom_call.1} parent=5 // pred_fallthru
        _
      %p129 = scmp.lt.s32.totalorder %s18, 2
      // Predicated region
      $region13: #{tpu_custom_call.1} parent=5 // pred_check
        %p130 = pneg %p129
      $region14: #{tpu_custom_call.1} parent=5 // pred_check_branch
        %132 = sbr.rel (%p130) target = $region16
      $region15: #{tpu_custom_call.1} parent=5 // pred_region
        // Predicated region
        $region17: #{tpu_custom_call.1} parent=15 // pred_check
          %p133 = pneg %p52
        $region18: #{tpu_custom_call.1} parent=15 // pred_check_branch
          %135 = sbr.rel (%p133) target = $region20
        $region19: #{tpu_custom_call.1} parent=15 // pred_region
          %s136 = sand.u32 %s42, 1
          %s137 = scalar_lea.sflag [#allocation3], %s136
          %s138 = sand.u32 %s42, 1
          %s139 = smul.addr %s138, 8
          %s140 = scalar_lea.vmem [#allocation2], %s139
          %s142 = ssub.s32 128, 128
          %143 = vsyncadd %s137, %s142
          %s144 = smul.addr %s25, 2
          %s145 = sadd.s32 %s26, %s144
          %s146 = smul.addr %s145, 128
          %s147 = scalar_lea.hbm %s0, %s146
          %s149 = sshll.u32 %s140, 4
          %s150 = int_to_ptr.vmem [resolvable:$true] %s149
          %152 = dma.hbm_to_vmem [thread:$0]  %s147, 128, %s150, %s137
        $region20: #{tpu_custom_call.1} parent=15 // pred_fallthru
          _
      $region16: #{tpu_custom_call.1} parent=5 // pred_fallthru
        _
      %p153 = scmp.le.s32.totalorder 1, %s18
      %p154 = scmp.lt.s32.totalorder %s18, 3
      %p155 = pnand %p153, %p154
      %p156 = pneg %p155
      // Predicated region
      $region21: #{tpu_custom_call.1} parent=5 // pred_check
        _
      $region22: #{tpu_custom_call.1} parent=5 // pred_check_branch
        %158 = sbr.rel (%p155) target = $region24
      $region23: #{tpu_custom_call.1} parent=5 // pred_region
        %s159 = ssub.s32 %s18, 1
        %s160 = sand.u32 %s45, 1
        %s161 = scalar_lea.sflag [#allocation3], %s160
        %s162 = sand.u32 %s45, 1
        %s163 = smul.addr %s162, 8
        %s164 = scalar_lea.vmem [#allocation2], %s163
        // Predicated region
        $region25: #{tpu_custom_call.1} parent=23 // pred_check
          %p165 = pneg %p58
        $region26: #{tpu_custom_call.1} parent=23 // pred_check_branch
          %167 = sbr.rel (%p165) target = $region28
        $region27: #{tpu_custom_call.1} parent=23 // pred_region
          %168 = dma.done %s161, 128
        $region28: #{tpu_custom_call.1} parent=23 // pred_fallthru
          _
        %s169 = sand.u32 %s45, 1
        %s170 = scalar_lea.sflag [#allocation3], %s169
        %s171 = sand.u32 %s45, 1
        %s172 = smul.addr %s171, 8
        %s173 = scalar_lea.vmem [#allocation2], %s172
        %p174 = pneg %p58
        %p175 = pneg %p55
        %p176 = pneg %p86
        %p177 = pneg %p83
        %s178 = sand.u32 %s73, 1
        %s179 = scalar_lea.sflag [#allocation4], %s178
        %s180 = sand.u32 %s73, 1
        %s181 = smul.addr %s180, 8
        %s182 = scalar_lea.vmem [#allocation5], %s181
        %p183 = pneg %p114
        %p184 = pneg %p111
        %s185 = sand.u32 %s101, 1
        %s186 = scalar_lea.sflag [#allocation7], %s185
        %s187 = sand.u32 %s101, 1
        %s188 = smul.addr %s187, 8
        %s189 = scalar_lea.vmem [#allocation6], %s188
        %v190 = vld [vmem:[%s164] sm:$0xff]
        %vm191 = vcmp.gt.f32.partialorder %v190, -0.85714287
        %v192 = vsel %vm191, 1, 0
        %v193 = vsel %vm191, -0.71428573, -1.0
        %vm194 = vcmp.gt.f32.partialorder %v190, -0.5714286
        %v195 = vsel %vm194, 1, 0
        %v196 = vadd.s32 %v192, %v195
        %v197 = vsel %vm194, -0.42857143, %v193
        %vm198 = vcmp.gt.f32.partialorder %v190, -0.28571427
        %v199 = vsel %vm198, 1, 0
        %v200 = vadd.s32 %v196, %v199
        %v201 = vsel %vm198, -0.14285709, %v197
        %vm202 = vcmp.gt.f32.partialorder %v190, 5.2154064e-08
        %v203 = vsel %vm202, 1, 0
        %v204 = vadd.s32 %v200, %v203
        %v205 = vsel %vm202, 0.1428572, %v201
        %vm206 = vcmp.gt.f32.partialorder %v190, 0.28571433
        %v207 = vsel %vm206, 1, 0
        %v208 = vadd.s32 %v204, %v207
        %v209 = vsel %vm206, 0.42857146, %v205
        %vm210 = vcmp.gt.f32.partialorder %v190, 0.57142866
        %v211 = vsel %vm210, 1, 0
        %v212 = vadd.s32 %v208, %v211
        %v213 = vsel %vm210, 0.71428585, %v209
        %vm214 = vcmp.gt.f32.partialorder %v190, 0.8571429
        %v215 = vsel %vm214, 1, 0
        %v216 = vadd.s32 %v212, %v215
        %v217 = vsel %vm214, 1.0, %v213
        %218 = vst [vmem:[%s182] sm:$0xff] %v217
        %219 = vst [vmem:[%s189] sm:$0xff] %v216
        %s220 = sand.u32 %s73, 1
        %s221 = scalar_lea.sflag [#allocation4], %s220
        %s222 = sand.u32 %s73, 1
        %s223 = smul.addr %s222, 8
        %s224 = scalar_lea.vmem [#allocation5], %s223
        %s225 = sand.u32 %s101, 1
        %s226 = scalar_lea.sflag [#allocation7], %s225
        %s227 = sand.u32 %s101, 1
        %s228 = smul.addr %s227, 8
        %s229 = scalar_lea.vmem [#allocation6], %s228
        // Predicated region
        $region29: #{tpu_custom_call.1} parent=23 // pred_check
          %p230 = pneg %p83
        $region30: #{tpu_custom_call.1} parent=23 // pred_check_branch
          %232 = sbr.rel (%p230) target = $region32
        $region31: #{tpu_custom_call.1} parent=23 // pred_region
          %s234 = ssub.s32 128, 128
          %235 = vsyncadd %s221, %s234
          %s236 = smul.addr %s27, 2
          %s237 = sadd.s32 %s28, %s236
          %s238 = smul.addr %s237, 128
          %s239 = scalar_lea.hbm %s1, %s238
          %s241 = sshll.u32 %s224, 4
          %s242 = int_to_ptr.vmem [resolvable:$true] %s241
          %244 = dma.vmem_to_hbm [thread:$0]  %s242, 128, %s239, %s221
        $region32: #{tpu_custom_call.1} parent=23 // pred_fallthru
          _
        // Predicated region
        $region33: #{tpu_custom_call.1} parent=23 // pred_check
          %p245 = pneg %p111
        $region34: #{tpu_custom_call.1} parent=23 // pred_check_branch
          %247 = sbr.rel (%p245) target = $region36
        $region35: #{tpu_custom_call.1} parent=23 // pred_region
          %s249 = ssub.s32 128, 128
          %250 = vsyncadd %s226, %s249
          %s251 = smul.addr %s27, 2
          %s252 = sadd.s32 %s28, %s251
          %s253 = smul.addr %s252, 128
          %s254 = scalar_lea.hbm %s2, %s253
          %s256 = sshll.u32 %s229, 4
          %s257 = int_to_ptr.vmem [resolvable:$true] %s256
          %259 = dma.vmem_to_hbm [thread:$0]  %s257, 128, %s254, %s226
        $region36: #{tpu_custom_call.1} parent=23 // pred_fallthru
          _
      $region24: #{tpu_custom_call.1} parent=5 // pred_fallthru
        _
      %p260 = scmp.le.s32.totalorder 2, %s18
      // Predicated region
      $region37: #{tpu_custom_call.1} parent=5 // pred_check
        %p261 = pneg %p260
      $region38: #{tpu_custom_call.1} parent=5 // pred_check_branch
        %263 = sbr.rel (%p261) target = $region40
      $region39: #{tpu_custom_call.1} parent=5 // pred_region
        %s264 = ssub.s32 %s18, 2
        // Predicated region
        $region41: #{tpu_custom_call.1} parent=39 // pred_check
          %p265 = pneg %p89
        $region42: #{tpu_custom_call.1} parent=39 // pred_check_branch
          %267 = sbr.rel (%p265) target = $region44
        $region43: #{tpu_custom_call.1} parent=39 // pred_region
          %s268 = sand.u32 %s74, 1
          %s269 = scalar_lea.sflag [#allocation4], %s268
          %s270 = sand.u32 %s74, 1
          %s271 = smul.addr %s270, 8
          %s272 = scalar_lea.vmem [#allocation5], %s271
          %273 = dma.done %s269, 128
        $region44: #{tpu_custom_call.1} parent=39 // pred_fallthru
          _
        // Predicated region
        $region45: #{tpu_custom_call.1} parent=39 // pred_check
          %p274 = pneg %p117
        $region46: #{tpu_custom_call.1} parent=39 // pred_check_branch
          %276 = sbr.rel (%p274) target = $region48
        $region47: #{tpu_custom_call.1} parent=39 // pred_region
          %s277 = sand.u32 %s102, 1
          %s278 = scalar_lea.sflag [#allocation7], %s277
          %s279 = sand.u32 %s102, 1
          %s280 = smul.addr %s279, 8
          %s281 = scalar_lea.vmem [#allocation6], %s280
          %282 = dma.done %s278, 128
        $region48: #{tpu_custom_call.1} parent=39 // pred_fallthru
          _
      $region40: #{tpu_custom_call.1} parent=5 // pred_fallthru
        _
    $region6: #{tpu_custom_call.1} parent=1 // loop_footer
      %s22 = sadd.s32 1, %s18
    $region7: #{tpu_custom_call.1} parent=1 // loop_footer_branch
      %17 = sbr.rel target = $region3
    $region8: #{tpu_custom_call.1} parent=1 // loop_exit
      _
    %283 = vsyncpa [#allocation3], 1
    %s284 = scalar_lea.sflag [#allocation3], 1
    %285 = vsyncpa %s284, 1
    %286 = vsyncpa [#allocation4], 1
    %s287 = scalar_lea.sflag [#allocation4], 1
    %288 = vsyncpa %s287, 1
    %289 = vsyncpa [#allocation7], 1
    %s290 = scalar_lea.sflag [#allocation7], 1
    %291 = vsyncpa %s290, 1

</llo_original>
